<compile_context>
chip_gen: v6e
topology: v6e:2x2x1
jax: 0.10.0
libtpu: 0.0.40
codegen_flags: <defaults>
</compile_context>

<pallas_src>
import functools

import jax
import jax.numpy as jnp
from jax.experimental import pallas as pl
from jax.experimental.pallas import tpu as pltpu


def _prototype_kernel(const_ref, a_ref, b_ref, out_ref, acc_ref, *,
                      feat, tk, num_k):
    """One grid step (i, k): accumulate squared diffs of one feature tile.

    const_ref : (1,)       SMEM   scalar  = -metric_scale / feat
    a_ref     : (TR, TK)   VMEM   sample-feature tile (native dtype)
    b_ref     : (TR, TK)   VMEM   batch-feature tile  (native dtype)
    out_ref   : (TR, 1)    VMEM   output tile (written on last feature step)
    acc_ref   : (TR, 128)  VMEM   lane-dense f32 partial sums (persists over k)
    """
    k = pl.program_id(1)
    last = num_k - 1

    @pl.when(k == 0)
    def _init():
        acc_ref[...] = jnp.zeros_like(acc_ref)

    def accumulate(tile_start):
        # tile_start is a STATIC global column offset (0 for full steps,
        # last*tk for the partial last step), so all masking decisions are
        # made at trace time.  Chunk slices are whole-vreg lane columns
        # (static, 128-wide) -> pure VPU mul/add, no XLU per step.
        acc = acc_ref[...]
        for lo in range(0, tk, 128):
            valid = feat - (tile_start + lo)          # static
            if valid <= 0:
                continue                              # chunk entirely padding
            a = a_ref[:, lo:lo + 128].astype(jnp.float32)
            b = b_ref[:, lo:lo + 128].astype(jnp.float32)
            d = a - b
            if valid < 128:                           # partial chunk: mask pad
                lane = jax.lax.broadcasted_iota(jnp.int32, d.shape, 1)
                d = jnp.where(lane < valid, d, 0.0)
            acc = acc + d * d
        acc_ref[...] = acc

    if feat % tk == 0:
        accumulate(0)                                 # all steps full, no mask
    elif num_k == 1:
        accumulate(0)                                 # single (masked) step
    else:
        # Mask only on the last feature step; full steps stay unmasked.
        pl.when(k != last)(lambda: accumulate(0))
        pl.when(k == last)(lambda: accumulate(last * tk))

    @pl.when(k == last)
    def _finalize():
        # One cross-lane reduce per row tile; const folds mean / scale / neg.
        out_ref[...] = (jnp.sum(acc_ref[...], axis=-1, keepdims=True)
                        * const_ref[0])


def _chip_generation():
    """Best-effort TPU generation (5/6/7) from device_kind; None if unknown."""
    try:
        kind = jax.devices()[0].device_kind.lower()
    except Exception:
        return None
    for g in (7, 6, 5):
        if f"v{g}" in kind:
            return g
    if "7x" in kind:
        return 7
    return None


def _choose_tiles(rows, feat, itemsize, target_tile_bytes, generation,
                  max_tk=8192):
    """Pick (tr, tk) respecting (8, 128) block rules and the VMEM budget."""
    assert max_tk % 128 == 0
    # Feature tile: round the feature axis UP to a multiple of 128 and cap it.
    # tk is therefore always a 128-multiple (in-kernel chunks are whole-vreg
    # columns) and a non-aligned feature size can never produce an unbounded
    # tile; padded lanes are masked in the kernel's last-step path.
    tk = min(((feat + 127) // 128) * 128, max_tk)

    # Row tile: multiple of 8 (or whole axis), sized to the target tile bytes.
    if rows <= 8:
        tr = rows
    else:
        budget_rows = max(8, (target_tile_bytes // (tk * itemsize)) // 8 * 8)
        tr = rows if budget_rows >= rows else budget_rows

    # v7x: 2 TensorCores share HBM; make sure the "parallel" row axis has at
    # least 2 steps so both cores (and their DMA issue) are used.
    if generation == 7 and rows > 8 and tr >= rows:
        half = ((-(-rows // 2)) + 7) // 8 * 8
        if half < rows:
            tr = half
    return tr, tk


def prototype_net_forward(sample_features_ext,
                          batch_features_ext,
                          metric_scale_param=None,
                          *,
                          metric_scale: bool = False,
                          target_tile_bytes=None,
                          max_tk: int = 8192,
                          force_pallas: bool = False):
    """Pallas implementation of PrototypeNet.forward.

    sample_features_ext / batch_features_ext: same shape,
        (num_batch, num_way, C, H, W)  (or any trailing feature dims).
    Returns (num_batch, num_way) float32: -mean squared distance, optionally
    scaled by metric_scale_param.
    """
    assert sample_features_ext.shape == batch_features_ext.shape
    b0, b1 = batch_features_ext.shape[0], batch_features_ext.shape[1]
    rows = b0 * b1
    feat = 1
    for d in batch_features_ext.shape[2:]:
        feat *= d

    # Keep native dtype -- no HBM-doubling f32 copy in the wrapper.
    a2d = sample_features_ext.reshape(rows, feat)
    b2d = batch_features_ext.reshape(rows, feat)

    # Fold mean-divide, optional metric scale, and negation into one scalar.
    inv = jnp.float32(-1.0 / feat)
    if metric_scale:
        assert metric_scale_param is not None
        const = metric_scale_param.reshape((1,)).astype(jnp.float32) * inv
    else:
        const = jnp.full((1,), inv, dtype=jnp.float32)

    # Small problems: pallas_call launch + grid setup (a few us) exceeds the
    # HBM traffic; let XLA fuse the whole thing instead.
    if not force_pallas and rows * feat < (1 << 21):
        d = a2d.astype(jnp.float32) - b2d.astype(jnp.float32)
        return (jnp.sum(d * d, axis=-1) * const[0]).reshape(b0, b1)

    gen = _chip_generation()
    if target_tile_bytes is None:
        # v6e/v7x: 4 MiB tiles amortize per-step overhead better; v5e/unknown
        # stays at 2 MiB (>85% of roofline already, smaller scoped default).
        target_tile_bytes = (4 << 20) if gen in (6, 7) else (2 << 20)
    # Scoped-VMEM cap: v7x only has 64 MiB physical per TC -> cap at 48 MiB.
    vmem_cap = {7: 48 << 20, 6: 32 << 20}.get(gen, 24 << 20)

    itemsize = jnp.dtype(a2d.dtype).itemsize
    tr, tk = _choose_tiles(rows, feat, itemsize, target_tile_bytes, gen,
                           max_tk=max_tk)

    # Safety: 2 inputs x 2 pipeline buffers must fit the cap with headroom.
    while tr > 8 and 4 * tr * tk * itemsize + (8 << 20) > vmem_cap:
        tr = max(8, (tr // 2) // 8 * 8)

    num_k = -(-feat // tk)
    grid = (-(-rows // tr), num_k)

    tile_bytes = tr * tk * itemsize
    needed = (2 * 2 * tile_bytes      # 2 inputs x double-buffered tiles
              + tr * 128 * 4          # lane-dense f32 accumulator scratch
              + 2 * tr * 4            # double-buffered (tr, 1) output
              + (1 << 20))            # per-chunk f32 upcast intermediates
    vmem_limit = int(min(vmem_cap, max(needed + (8 << 20), 16 << 20)))

    kernel = functools.partial(_prototype_kernel, feat=feat, tk=tk,
                               num_k=num_k)

    # NOTE: pipeline_mode=pl.Buffered(3) on the input specs is a v6e-only
    # option if an xprof trace shows exposed DMA gaps; default double
    # buffering is kept here for portability (and to spare v7x VMEM).
    out = pl.pallas_call(
        kernel,
        out_shape=jax.ShapeDtypeStruct((rows, 1), jnp.float32),
        grid_spec=pltpu.PrefetchScalarGridSpec(
            num_scalar_prefetch=0,
            grid=grid,
            in_specs=[
                pl.BlockSpec(memory_space=pltpu.MemorySpace.SMEM),   # const
                pl.BlockSpec((tr, tk), lambda i, k: (i, k)),         # sample
                pl.BlockSpec((tr, tk), lambda i, k: (i, k)),         # batch
            ],
            out_specs=pl.BlockSpec((tr, 1), lambda i, k: (i, 0)),
            scratch_shapes=[pltpu.VMEM((tr, 128), jnp.float32)],
        ),
        compiler_params=pltpu.CompilerParams(
            dimension_semantics=("parallel", "arbitrary"),
            vmem_limit_bytes=vmem_limit),
    )(const, a2d, b2d)

    return out.reshape(b0, b1)


def _reference(sample_features_ext, batch_features_ext, scale, metric_scale):
    """Pure-JAX reference mirroring the PyTorch forward (f32 math)."""
    a = sample_features_ext.astype(jnp.float32)
    b = batch_features_ext.astype(jnp.float32)
    d = (a - b) ** 2
    b0, b1 = batch_features_ext.shape[0], batch_features_ext.shape[1]
    d = d.reshape(b0, b1, -1).mean(axis=2)
    if metric_scale:
        d = d * scale[0]
    return -d


if __name__ == "__main__":
    key = jax.random.PRNGKey(0)
    k1, k2, k3, k4 = jax.random.split(key, 4)

    # Case 1: (num_batch, num_way, C, H, W) f32 feature maps, metric scale on.
    num_batch, num_way, C, H, W = 2, 4, 4, 8, 8
    sample_f32 = jax.random.normal(
        k1, (num_batch, num_way, C, H, W), dtype=jnp.float32)
    batch_f32 = jax.random.normal(
        k2, (num_batch, num_way, C, H, W), dtype=jnp.float32)
    # Deterministic init of metric_scale_param (torch leaves it uninitialized).
    metric_scale_param = jnp.array([0.5], dtype=jnp.float32)

    out = prototype_net_forward(
        sample_f32, batch_f32, metric_scale_param,
        metric_scale=True, force_pallas=True)
    out = jax.block_until_ready(out)
    ref = _reference(sample_f32, batch_f32, metric_scale_param, True)
    assert out.shape == (num_batch, num_way)
    assert jnp.allclose(out, ref, atol=1e-4, rtol=1e-5), (out, ref)

    # Case 2: bf16 inputs (native-dtype DMA + in-kernel f32 upcast).
    sample_bf16 = sample_f32.astype(jnp.bfloat16)
    batch_bf16 = batch_f32.astype(jnp.bfloat16)
    out_bf16 = prototype_net_forward(
        sample_bf16, batch_bf16, metric_scale_param,
        metric_scale=True, force_pallas=True)
    out_bf16 = jax.block_until_ready(out_bf16)
    ref_bf16 = _reference(sample_bf16, batch_bf16, metric_scale_param, True)
    assert jnp.allclose(out_bf16, ref_bf16, atol=1e-3, rtol=1e-3), (out_bf16,
                                                                    ref_bf16)

    # Case 3: non-128-aligned feature size (feat = 8*19*19 = 2888) with a
    # forced small feature tile (max_tk=256) to exercise the multi-step
    # lane-dense accumulator and the last-step-only padded-lane masking.
    nb2, nw2, C2, H2, W2 = 2, 8, 8, 19, 19
    s2 = jax.random.normal(k3, (nb2, nw2, C2, H2, W2), dtype=jnp.float32)
    b2 = jax.random.normal(k4, (nb2, nw2, C2, H2, W2), dtype=jnp.float32)
    out2 = prototype_net_forward(
        s2, b2, metric_scale=False, force_pallas=True, max_tk=256)
    out2 = jax.block_until_ready(out2)
    ref2 = _reference(s2, b2, None, False)
    assert out2.shape == (nb2, nw2)
    assert jnp.allclose(out2, ref2, atol=1e-4, rtol=1e-5), (out2, ref2)

    print("KERNEL_OK")
</pallas_src>

<mosaic_0001>
module attributes {stable_mosaic.version = 11 : i64} {
  func.func @_prototype_kernel(%arg0: i32, %arg1: i32, %arg2: memref<1xf32, #tpu.memory_space<smem>>, %arg3: memref<8x256xf32, #tpu.memory_space<vmem>>, %arg4: memref<8x256xf32, #tpu.memory_space<vmem>>, %arg5: memref<8x1xf32, #tpu.memory_space<vmem>>, %arg6: memref<8x128xf32, #tpu.memory_space<vmem>>) attributes {dimension_semantics = [#tpu.dimension_semantics<parallel>, #tpu.dimension_semantics<arbitrary>], iteration_bounds = array<i64: 1, 1>, scalar_prefetch = 0 : i64, scratch_operands = 1 : i64, tpu.core_type = #tpu.core_type<tc>, window_params = [{transform_indices = @transform_0, window_bounds = array<i64: 1>}, {transform_indices = @transform_1, window_bounds = array<i64: 8, 256>}, {transform_indices = @transform_2, window_bounds = array<i64: 8, 256>}, {transform_indices = @transform_3, window_bounds = array<i64: 8, 1>}]} {
    %c0_i32 = arith.constant 0 : i32
    %0 = arith.cmpi eq, %arg1, %c0_i32 : i32
    %1 = arith.extui %0 : i1 to i32
    %c0_i32_0 = arith.constant 0 : i32
    %2 = arith.cmpi ne, %1, %c0_i32_0 : i32
    scf.if %2 {
      %cst = arith.constant 0.000000e+00 : f32
      %18 = vector.broadcast %cst : f32 to vector<8x128xf32>
      %c0_13 = arith.constant 0 : index
      %c0_14 = arith.constant 0 : index
      %19 = vector.load %arg6[%c0_13, %c0_14] : memref<8x128xf32, #tpu.memory_space<vmem>>, vector<8x128xf32>
      tpu.vector_store %arg6[%c0_13, %c0_14], %18 {strides = array<i32>} : memref<8x128xf32, #tpu.memory_space<vmem>>, vector<8x128xf32>,
    } else {
    }
    %c0 = arith.constant 0 : index
    %c0_1 = arith.constant 0 : index
    %3 = vector.load %arg6[%c0, %c0_1] : memref<8x128xf32, #tpu.memory_space<vmem>>, vector<8x128xf32>
    %c0_2 = arith.constant 0 : index
    %c0_3 = arith.constant 0 : index
    %4 = vector.load %arg3[%c0_2, %c0_3] : memref<8x256xf32, #tpu.memory_space<vmem>>, vector<8x128xf32>
    %c0_4 = arith.constant 0 : index
    %c0_5 = arith.constant 0 : index
    %5 = vector.load %arg4[%c0_4, %c0_5] : memref<8x256xf32, #tpu.memory_space<vmem>>, vector<8x128xf32>
    %6 = arith.subf %4, %5 : vector<8x128xf32>
    %7 = arith.mulf %6, %6 : vector<8x128xf32>
    %8 = arith.addf %3, %7 : vector<8x128xf32>
    %c0_6 = arith.constant 0 : index
    %c128 = arith.constant 128 : index
    %9 = vector.load %arg3[%c0_6, %c128] : memref<8x256xf32, #tpu.memory_space<vmem>>, vector<8x128xf32>
    %c0_7 = arith.constant 0 : index
    %c128_8 = arith.constant 128 : index
    %10 = vector.load %arg4[%c0_7, %c128_8] : memref<8x256xf32, #tpu.memory_space<vmem>>, vector<8x128xf32>
    %11 = arith.subf %9, %10 : vector<8x128xf32>
    %12 = arith.mulf %11, %11 : vector<8x128xf32>
    %13 = arith.addf %8, %12 : vector<8x128xf32>
    %c0_9 = arith.constant 0 : index
    %c0_10 = arith.constant 0 : index
    %14 = vector.load %arg6[%c0_9, %c0_10] : memref<8x128xf32, #tpu.memory_space<vmem>>, vector<8x128xf32>
    tpu.vector_store %arg6[%c0_9, %c0_10], %13 {strides = array<i32>} : memref<8x128xf32, #tpu.memory_space<vmem>>, vector<8x128xf32>,
    %c0_i32_11 = arith.constant 0 : i32
    %15 = arith.cmpi eq, %arg1, %c0_i32_11 : i32
    %16 = arith.extui %15 : i1 to i32
    %c0_i32_12 = arith.constant 0 : i32
    %17 = arith.cmpi ne, %16, %c0_i32_12 : i32
    scf.if %17 {
      %c0_13 = arith.constant 0 : index
      %c0_14 = arith.constant 0 : index
      %18 = vector.load %arg6[%c0_13, %c0_14] : memref<8x128xf32, #tpu.memory_space<vmem>>, vector<8x128xf32>
      %cst = arith.constant dense<0.000000e+00> : vector<8xf32>
      %19 = vector.multi_reduction <add>, %18, %cst [1] : vector<8x128xf32> to vector<8xf32>
      %20 = vector.shape_cast %19 : vector<8xf32> to vector<8x1xf32>
      %c0_15 = arith.constant 0 : index
      %21 = memref.load %arg2[%c0_15] : memref<1xf32, #tpu.memory_space<smem>>
      %22 = vector.broadcast %21 : f32 to vector<8x1xf32>
      %23 = arith.mulf %20, %22 : vector<8x1xf32>
      %c0_16 = arith.constant 0 : index
      %c0_17 = arith.constant 0 : index
      %24 = vector.load %arg5[%c0_16, %c0_17] : memref<8x1xf32, #tpu.memory_space<vmem>>, vector<8x1xf32>
      tpu.vector_store %arg5[%c0_16, %c0_17], %23 {strides = array<i32>} : memref<8x1xf32, #tpu.memory_space<vmem>>, vector<8x1xf32>,
    } else {
    }
    return
  }
  func.func @transform_0(%arg0: i32, %arg1: i32) -> i32 {
    %c0_i32 = arith.constant 0 : i32
    %c0_i32_0 = arith.constant 0 : i32
    return %c0_i32 : i32
  }
  func.func @transform_1(%arg0: i32, %arg1: i32) -> (i32, i32) {
    %c0_i32 = arith.constant 0 : i32
    return %arg0, %arg1 : i32, i32
  }
  func.func @transform_2(%arg0: i32, %arg1: i32) -> (i32, i32) {
    %c0_i32 = arith.constant 0 : i32
    return %arg0, %arg1 : i32, i32
  }
  func.func @transform_3(%arg0: i32, %arg1: i32) -> (i32, i32) {
    %c0_i32 = arith.constant 0 : i32
    %c0_i32_0 = arith.constant 0 : i32
    return %arg0, %c0_i32 : i32, i32
  }
}

</mosaic_0001>

<llo_original>
// kernel: tpu_custom_call.1
$region0: #{tpu_custom_call.1}
  #allocation0 [shape = 'u32[]', space=smem, size = 0x4, offset = 0x4, fixed_abs, tag = 'smem constant byte address 0x4 - core index']
  #allocation1 [shape = 'u32[144,128]{1,0:T(1,128)}', space=vmem, size = 0x12000, scoped, tag = 'internal scratch']
  #allocation2 [shape = 'f32[8,128]{1,0:T(8,128)}', space=vmem, size = 0x1000, scoped, tag = 'scratch operand']
  #allocation3 [shape = 'f32[1]{0:T(128)S(6)}', space=smem, size = 0x200, scoped, tag = 'scoped memory for tpu_custom_call.1']
  %s0 = inlined_call_operand.<no memory space> [shape: f32[1], index: 0, kind: input, shape index: {}]
  %s1 = inlined_call_operand.hbm [shape: f32[8,256], index: 1, kind: input, shape index: {}]
  %s2 = inlined_call_operand.hbm [shape: f32[8,256], index: 2, kind: input, shape index: {}]
  %s3 = inlined_call_operand.vmem [shape: f32[8,1], index: 3, kind: output, shape index: {}]
  %s4 = sld [smem:[#allocation0]]
  $region38: #{tpu_custom_call.1} parent=0
    _
  %s6 = ssub.s32 1, %s4
  %s7 = scalar_select 0, %s6, %s4
  %8 = sst [smem:[#allocation3]] %s0
  $region1: #{tpu_custom_call.1} parent=0
    #allocation4 [shape = 'u8[8192]{0}', space=vmem, size = 0x2000, scoped, tag = 'input window, operand 1, single buffered']
    #allocation5 [shape = 's32[1]{0}', space=sflag, size = 0x4, scoped, tag = 'scoped memory for tpu_custom_call.1']
    #allocation6 [shape = 'u8[8192]{0}', space=vmem, size = 0x2000, scoped, tag = 'input window, operand 2, single buffered']
    #allocation7 [shape = 's32[1]{0}', space=sflag, size = 0x4, scoped, tag = 'scoped memory for tpu_custom_call.1']
    %9 = vsyncpa [#allocation5], 0
    %10 = vsyncpa [#allocation7], 0
    // Predicated region
    $region2: #{tpu_custom_call.1} parent=1 // pred_check
      _
    $region3: #{tpu_custom_call.1} parent=1 // pred_check_branch
      %12 = sbr.rel (0) target = $region5
    $region4: #{tpu_custom_call.1} parent=1 // pred_region
      _
    $region5: #{tpu_custom_call.1} parent=1 // pred_fallthru
      _
    // Predicated region
    $region6: #{tpu_custom_call.1} parent=1 // pred_check
      _
    $region7: #{tpu_custom_call.1} parent=1 // pred_check_branch
      %14 = sbr.rel (0) target = $region9
    $region8: #{tpu_custom_call.1} parent=1 // pred_region
      %s16 = ssub.s32 256, 256
      %17 = vsyncadd [#allocation5], %s16
      %s19 = sshll.u32 [#allocation4], 4
      %s20 = int_to_ptr.vmem [resolvable:$true] %s19
      %22 = dma.hbm_to_vmem [thread:$0]  %s1, 256, %s20, [#allocation5]
    $region9: #{tpu_custom_call.1} parent=1 // pred_fallthru
      _
    // Predicated region
    $region10: #{tpu_custom_call.1} parent=1 // pred_check
      _
    $region11: #{tpu_custom_call.1} parent=1 // pred_check_branch
      %24 = sbr.rel (0) target = $region13
    $region12: #{tpu_custom_call.1} parent=1 // pred_region
      %s26 = ssub.s32 256, 256
      %27 = vsyncadd [#allocation7], %s26
      %s29 = sshll.u32 [#allocation6], 4
      %s30 = int_to_ptr.vmem [resolvable:$true] %s29
      %32 = dma.hbm_to_vmem [thread:$0]  %s2, 256, %s30, [#allocation7]
    $region13: #{tpu_custom_call.1} parent=1 // pred_fallthru
      _
    // Predicated region
    $region14: #{tpu_custom_call.1} parent=1 // pred_check
      _
    $region15: #{tpu_custom_call.1} parent=1 // pred_check_branch
      %34 = sbr.rel (0) target = $region17
    $region16: #{tpu_custom_call.1} parent=1 // pred_region
      %35 = dma.done [#allocation5], 256
    $region17: #{tpu_custom_call.1} parent=1 // pred_fallthru
      _
    // Predicated region
    $region18: #{tpu_custom_call.1} parent=1 // pred_check
      _
    $region19: #{tpu_custom_call.1} parent=1 // pred_check_branch
      %37 = sbr.rel (0) target = $region21
    $region20: #{tpu_custom_call.1} parent=1 // pred_region
      %38 = dma.done [#allocation7], 256
    $region21: #{tpu_custom_call.1} parent=1 // pred_fallthru
      _
    %p39 = scmp.eq.s32.totalorder 0, 0
    // Predicated region
    $region22: #{tpu_custom_call.1} parent=1 // pred_check
      %p40 = pneg %p39
    $region23: #{tpu_custom_call.1} parent=1 // pred_check_branch
      %42 = sbr.rel (%p40) target = $region25
    $region24: #{tpu_custom_call.1} parent=1 // pred_region
      %43 = vst [vmem:[#allocation2] sm:$0xff] 0.0
    $region25: #{tpu_custom_call.1} parent=1 // pred_fallthru
      _
    %v44 = vld [vmem:[#allocation2] sm:$0xff]
    %v45 = vld [vmem:[#allocation4] sm:$0xff]
    %v46 = vld [vmem:[#allocation6] sm:$0xff]
    %v47 = vsub.f32 %v45, %v46
    %v48 = vmul.f32 %v47, %v47
    %v49 = vadd.f32 %v44, %v48
    %v50 = vld [vmem:[#allocation4 + $0x8] sm:$0xff]
    %v51 = vld [vmem:[#allocation6 + $0x8] sm:$0xff]
    %v52 = vsub.f32 %v50, %v51
    %v53 = vmul.f32 %v52, %v52
    %v54 = vadd.f32 %v49, %v53
    %55 = vst [vmem:[#allocation2] sm:$0xff] %v54
    // Predicated region
    $region26: #{tpu_custom_call.1} parent=1 // pred_check
      %p56 = pneg %p39
    $region27: #{tpu_custom_call.1} parent=1 // pred_check_branch
      %58 = sbr.rel (%p56) target = $region29
    $region28: #{tpu_custom_call.1} parent=1 // pred_region
      %v59 = vld [vmem:[#allocation2] sm:$0xff]
      %60 = vadd.xlane.f32.xlu0 %v59
      %v61 = vpop.xlane.xlu0 %60
      %s62 = sld [smem:[#allocation3]]
      %v63 = vstv %s62
      %v64 = vmul.f32 %v61, %v63
      %vm65 = vcmask 7168
      %66 = vst.msk [vmem:[%s3] sm:$0xff] %vm65, %v64
    $region29: #{tpu_custom_call.1} parent=1 // pred_fallthru
      _
    // Predicated region
    $region30: #{tpu_custom_call.1} parent=1 // pred_check
      _
    $region31: #{tpu_custom_call.1} parent=1 // pred_check_branch
      %68 = sbr.rel (0) target = $region33
    $region32: #{tpu_custom_call.1} parent=1 // pred_region
      _
    $region33: #{tpu_custom_call.1} parent=1 // pred_fallthru
      _
    // Predicated region
    $region34: #{tpu_custom_call.1} parent=1 // pred_check
      _
    $region35: #{tpu_custom_call.1} parent=1 // pred_check_branch
      %70 = sbr.rel (0) target = $region37
    $region36: #{tpu_custom_call.1} parent=1 // pred_region
      _
    $region37: #{tpu_custom_call.1} parent=1 // pred_fallthru
      _
    %71 = vsyncpa [#allocation5], 1
    %72 = vsyncpa [#allocation7], 1

</llo_original>
